<compile_context>
chip_gen: v7x
topology: tpu7x:2x2x1
jax: 0.10.0
libtpu: 0.0.40
codegen_flags: <defaults>
</compile_context>

<pallas_src>
import jax
import jax.numpy as jnp
from jax.experimental import pallas as pl
from jax.experimental.pallas import tpu as pltpu


def _concat_dma_kernel(x1_hbm, x2_hbm, out_hbm, sem):
    """HBM->HBM channel concat.

    x1_hbm: (N, F1), x2_hbm: (N, F2), out_hbm: (N, F1 + F2); all refs live in HBM
    (memory_space=pl.ANY).  Two DMAs are started back-to-back so they overlap on the
    DMA engines, then both are waited on.
    """
    f1 = x1_hbm.shape[1]
    cp1 = pltpu.make_async_copy(x1_hbm, out_hbm.at[:, :f1], sem.at[0])
    cp2 = pltpu.make_async_copy(x2_hbm, out_hbm.at[:, f1:], sem.at[1])
    cp1.start()
    cp2.start()
    cp1.wait()
    cp2.wait()


def my_model_forward(input1, input2):
    """Pallas implementation of MyModel.forward (identity encoders/decoder + channel concat)."""
    assert input1.shape[0] == input2.shape[0]
    assert input1.shape[2:] == input2.shape[2:]
    assert input1.dtype == input2.dtype

    n, c1, h, w = input1.shape
    c2 = input2.shape[1]
    f1 = c1 * h * w
    f2 = c2 * h * w

    # Lane-/row-dense flattened views: per-batch-row channel blocks stay contiguous, so
    # concat over flattened rows == concat over channels in NCHW.  Reshape of a contiguous
    # array is free (metadata only).
    x1 = input1.reshape(n, f1)
    x2 = input2.reshape(n, f2)

    out_flat = pl.pallas_call(
        _concat_dma_kernel,
        out_shape=jax.ShapeDtypeStruct((n, f1 + f2), input1.dtype),
        in_specs=[
            pl.BlockSpec(memory_space=pl.ANY),
            pl.BlockSpec(memory_space=pl.ANY),
        ],
        out_specs=pl.BlockSpec(memory_space=pl.ANY),
        scratch_shapes=[pltpu.SemaphoreType.DMA((2,))],
        compiler_params=pltpu.CompilerParams(has_side_effects=True),
    )(x1, x2)

    return out_flat.reshape(n, c1 + c2, h, w)


if __name__ == "__main__":
    key = jax.random.PRNGKey(0)
    k1, k2 = jax.random.split(key)

    # Small shapes consistent with the module: NCHW, concat over channels (dim=1).
    x1 = jax.random.normal(k1, (2, 4, 16, 16), dtype=jnp.float32)
    x2 = jax.random.normal(k2, (2, 4, 16, 16), dtype=jnp.float32)

    out = my_model_forward(x1, x2)
    out = jax.block_until_ready(out)

    # Correctness check vs. plain JAX reference (torch.cat(dim=1) semantics).
    ref = jnp.concatenate([x1, x2], axis=1)
    assert out.shape == ref.shape, (out.shape, ref.shape)
    assert jnp.array_equal(out, ref)

    print("KERNEL_OK")
</pallas_src>

<mosaic_0001>
module attributes {stable_mosaic.version = 11 : i64} {
  func.func @_concat_dma_kernel(%arg0: memref<2x1024xf32, #tpu.memory_space<any>>, %arg1: memref<2x1024xf32, #tpu.memory_space<any>>, %arg2: memref<2x2048xf32, #tpu.memory_space<any>>, %arg3: memref<2x!tpu.dma_semaphore, #tpu.memory_space<semaphore_mem>>) attributes {dimension_semantics = [], scalar_prefetch = 0 : i64, scratch_operands = 1 : i64, tpu.core_type = #tpu.core_type<tc>} {
    %c0_i32 = arith.constant 0 : i32
    %c0_i32_0 = arith.constant 0 : i32
    %c0_i32_1 = arith.constant 0 : i32
    %0 = tpu.memref_slice %arg2[%c0_i32_0, %c0_i32_1] : memref<2x2048xf32, #tpu.memory_space<any>> -> memref<2x1024xf32, #tpu.memory_space<any>>
    %1 = tpu.memref_slice %arg3[%c0_i32] : memref<2x!tpu.dma_semaphore, #tpu.memory_space<semaphore_mem>> -> memref<1x!tpu.dma_semaphore, #tpu.memory_space<semaphore_mem>>
    %2 = tpu.memref_squeeze %1 : memref<1x!tpu.dma_semaphore, #tpu.memory_space<semaphore_mem>> -> memref<!tpu.dma_semaphore, #tpu.memory_space<semaphore_mem>>
    tpu.enqueue_dma source(%arg0 : memref<2x1024xf32, #tpu.memory_space<any>>) target(%0 : memref<2x1024xf32, #tpu.memory_space<any>>) target_semaphore(%2 : memref<!tpu.dma_semaphore, #tpu.memory_space<semaphore_mem>>)
    %c1_i32 = arith.constant 1 : i32
    %c0_i32_2 = arith.constant 0 : i32
    %c1024_i32 = arith.constant 1024 : i32
    %3 = tpu.memref_slice %arg2[%c0_i32_2, %c1024_i32] : memref<2x2048xf32, #tpu.memory_space<any>> -> memref<2x1024xf32, #tpu.memory_space<any>>
    %4 = tpu.memref_slice %arg3[%c1_i32] : memref<2x!tpu.dma_semaphore, #tpu.memory_space<semaphore_mem>> -> memref<1x!tpu.dma_semaphore, #tpu.memory_space<semaphore_mem>>
    %5 = tpu.memref_squeeze %4 : memref<1x!tpu.dma_semaphore, #tpu.memory_space<semaphore_mem>> -> memref<!tpu.dma_semaphore, #tpu.memory_space<semaphore_mem>>
    tpu.enqueue_dma source(%arg1 : memref<2x1024xf32, #tpu.memory_space<any>>) target(%3 : memref<2x1024xf32, #tpu.memory_space<any>>) target_semaphore(%5 : memref<!tpu.dma_semaphore, #tpu.memory_space<semaphore_mem>>)
    %c0_i32_3 = arith.constant 0 : i32
    %c0_i32_4 = arith.constant 0 : i32
    %c0_i32_5 = arith.constant 0 : i32
    %6 = tpu.memref_slice %arg2[%c0_i32_4, %c0_i32_5] : memref<2x2048xf32, #tpu.memory_space<any>> -> memref<2x1024xf32, #tpu.memory_space<any>>
    %7 = tpu.memref_slice %arg3[%c0_i32_3] : memref<2x!tpu.dma_semaphore, #tpu.memory_space<semaphore_mem>> -> memref<1x!tpu.dma_semaphore, #tpu.memory_space<semaphore_mem>>
    %8 = tpu.memref_squeeze %7 : memref<1x!tpu.dma_semaphore, #tpu.memory_space<semaphore_mem>> -> memref<!tpu.dma_semaphore, #tpu.memory_space<semaphore_mem>>
    tpu.wait_dma2 semaphore(%8 : memref<!tpu.dma_semaphore, #tpu.memory_space<semaphore_mem>>) src(%arg0 : memref<2x1024xf32, #tpu.memory_space<any>>) dst(%6 : memref<2x1024xf32, #tpu.memory_space<any>>)
    %c1_i32_6 = arith.constant 1 : i32
    %c0_i32_7 = arith.constant 0 : i32
    %c1024_i32_8 = arith.constant 1024 : i32
    %9 = tpu.memref_slice %arg2[%c0_i32_7, %c1024_i32_8] : memref<2x2048xf32, #tpu.memory_space<any>> -> memref<2x1024xf32, #tpu.memory_space<any>>
    %10 = tpu.memref_slice %arg3[%c1_i32_6] : memref<2x!tpu.dma_semaphore, #tpu.memory_space<semaphore_mem>> -> memref<1x!tpu.dma_semaphore, #tpu.memory_space<semaphore_mem>>
    %11 = tpu.memref_squeeze %10 : memref<1x!tpu.dma_semaphore, #tpu.memory_space<semaphore_mem>> -> memref<!tpu.dma_semaphore, #tpu.memory_space<semaphore_mem>>
    tpu.wait_dma2 semaphore(%11 : memref<!tpu.dma_semaphore, #tpu.memory_space<semaphore_mem>>) src(%arg1 : memref<2x1024xf32, #tpu.memory_space<any>>) dst(%9 : memref<2x1024xf32, #tpu.memory_space<any>>)
    return
  }
}

</mosaic_0001>

<llo_original>
// kernel: tpu_custom_call.1
$region0: #{tpu_custom_call.1}
  #allocation0 [shape = 'u32[]', space=smem, size = 0x4, offset = 0x4, fixed_abs, tag = 'smem constant byte address 0x4 - core index']
  #allocation1 [shape = 'u32[144,128]{1,0:T(1,128)}', space=vmem, size = 0x12000, scoped, tag = 'internal scratch']
  #allocation2 [shape = 's32[2]{0}', space=sflag, size = 0x8, scoped, tag = 'scratch operand']
  #allocation3 [shape = 's32[]', space=sflag, size = 0x4, offset = 0, fixed_abs, tag = 'sflag constant byte address 0x0 - dummy sync flag']
  #allocation4 [shape = 'u32[0]{0}', space=smem, size = 0, offset = 0, fixed_abs, tag = 'smem constant byte address 0x0 - null']
  #allocation5 [shape = 's32[]', space=sflag, size = 0x4, offset = 0, fixed_abs, tag = 'sflag constant byte address 0x0 - dummy sync flag']
  #allocation6 [shape = 'u32[0]{0}', space=smem, size = 0, offset = 0, fixed_abs, tag = 'smem constant byte address 0x0 - null']
  %s0 = inlined_call_operand.hbm [shape: f32[2,1024], index: 0, kind: input, shape index: {}]
  %s1 = inlined_call_operand.hbm [shape: f32[2,1024], index: 1, kind: input, shape index: {}]
  %s2 = inlined_call_operand.hbm [shape: f32[2,2048], index: 2, kind: output, shape index: {}]
  %s3 = sld [smem:[#allocation0]]
  $region2: #{tpu_custom_call.1} parent=0
    _
  %s5 = ssub.s32 1, %s3
  %s6 = scalar_select 0, %s5, %s3
  %s8 = sshll.u32 1, 14
  %s9 = sxor.u32 4294967295, %s8
  %s12 = sshll.u32 3, 24
  %s13 = sxor.u32 4294967295, %s12
  %s14 = sand.u32 0, %s13
  %s16 = sor.u32 %s14, 0
  %19 = dma.general %s0, 256, %s2, [#allocation2], [#allocation3], [#allocation4], %s16, 0
  %s20 = scalar_lea.hbm %s2, 256
  %s21 = scalar_lea.sflag [#allocation2], 1
  %s23 = sshll.u32 1, 14
  %s24 = sxor.u32 4294967295, %s23
  %s27 = sshll.u32 3, 24
  %s28 = sxor.u32 4294967295, %s27
  %s29 = sand.u32 0, %s28
  %s31 = sor.u32 %s29, 0
  %34 = dma.general %s1, 256, %s20, %s21, [#allocation5], [#allocation6], %s31, 0
  %s35 = smul.u32 2, 1
  %s36 = smul.u32 %s35, 8
  %s37 = sshll.u32 %s36, 4
  %38 = dma.done [#allocation2], %s37
  %s39 = sshll.u32 %s36, 4
  %40 = dma.done %s21, %s39
  %41 = vsyncmov [#allocation2]
  %s42 = vpop.sfrf %41
  %p43 = scmp.eq.s32.totalorder %s42, 0
  %p44 = pneg %p43
  %46 = shalt.err (%p44)
  %s47 = scalar_lea.sflag [#allocation2], 1
  %48 = vsyncmov %s47
  %s49 = vpop.sfrf %48
  %p50 = scmp.eq.s32.totalorder %s49, 0
  %p51 = pneg %p50
  %53 = shalt.err (%p51)

</llo_original>
